<compile_context>
chip_gen: v5e
topology: v5e:2x2
jax: 0.10.0
libtpu: 0.0.40
codegen_flags: <defaults>
</compile_context>

<pallas_src>
import functools
import math

import jax
import jax.numpy as jnp
import numpy as np
from jax.experimental import pallas as pl
from jax.experimental.pallas import tpu as pltpu


# ---------------- config (mirrors the cfg.* fields the torch module touches) --
class _BackNet:
    back_net_on = False          # TODO(synk): back_net branch disabled; no synthetic equivalent of the pretrained back-view net.


class CFG:
    N_samples = 32
    perturb = 0.0
    use_back_img_gt = False
    back_net = _BackNet()


cfg = CFG()

N_RAYS = 64
PE_L = 4                          # positional-encoding octaves -> 3 + 3*2*4 = 27 dims
PE_DIM = 3 + 3 * 2 * PE_L         # 27
PE_PAD = 32                       # padded to a lane-friendly width
PTS_PAD = 8                       # xyz padded to 8 cols (MXU-friendly K)
HIDDEN = 64
RAW_CH = 8                        # 4 real channels (r,g,b,sigma) padded to 8
OUT_PAD = 128                     # lane-dense packed render output width
IMG_C, IMG_H, IMG_W = 3, 32, 32
FMAP_C = 16
CONV_K_PAD = 32                   # 9*IMG_C = 27 im2col columns padded to 32


def _num_render_steps():
    """1 grid step on single-TC chips (v5e/v6e), 2 parallel steps on v7x."""
    try:
        kind = jax.devices()[0].device_kind.lower()
    except Exception:
        return 1
    return 2 if ("v7" in kind or "7x" in kind) else 1


# ============================ Pallas kernels ==================================
def _conv_pool_kernel(x_ref, w_ref, b_ref, fmap_ref, pool_ref):
    # im2col conv as one matmul (bf16 MXU operands, f32 acc, ReLU) with the
    # global mean pool fused in, so the fmap is not re-read from HBM.
    y = jnp.dot(x_ref[...].astype(jnp.bfloat16),
                w_ref[...].astype(jnp.bfloat16),
                preferred_element_type=jnp.float32) + b_ref[...]
    y = jnp.maximum(y, 0.0)
    fmap_ref[...] = y
    pool_ref[...] = jnp.mean(y, axis=0, keepdims=True)   # back branch off -> 1 image


def _fused_pe_mlp_render_kernel(pts_ref, zd_ref, e_ref,
                                w1_ref, b1_ref, w2_ref, b2_ref, w3_ref, b3_ref,
                                out_ref, *, ns):
    """PE + 3-layer MLP + volume rendering for one tile of rays.

    MLP runs on flattened ray-major points (p = ray * ns + sample); the render
    stage runs per-ray with samples on the lane axis.  Only the packed
    (tile_rays, 128) slab is stored to HBM.
    """
    tr = out_ref.shape[0]                     # rays in this block

    # ---- lane-dense positional encoding: 1 tiny MXU op + 1 EUP pass ----
    # ang[:, 0:3] = xyz (identity cols of E), ang[:, 3:15] / [15:27] = 2^l * xyz.
    ang = jnp.dot(pts_ref[...], e_ref[...], preferred_element_type=jnp.float32)
    col = jax.lax.broadcasted_iota(jnp.int32, (1, PE_PAD), 1)
    is_cos = jnp.logical_and(col >= 3 + 3 * PE_L, col < PE_DIM)
    phase = jnp.where(is_cos, jnp.float32(0.5 * math.pi), jnp.float32(0.0))
    # cols 0..2 passthrough, sin block phase 0, cos block phase pi/2,
    # padding cols (>= PE_DIM): E columns are zero -> sin(0) = 0.
    pe = jnp.where(col < 3, ang, jnp.sin(ang + phase))            # (P, 32) f32

    # ---- fused 3-layer MLP (bf16 MXU operands, f32 accumulation) ----
    # pose-latent + pooled-image-feature conditioning is folded into b1 outside.
    h = jnp.dot(pe.astype(jnp.bfloat16), w1_ref[...],
                preferred_element_type=jnp.float32)
    h = jnp.maximum(h + b1_ref[...], 0.0)
    h = jnp.dot(h.astype(jnp.bfloat16), w2_ref[...],
                preferred_element_type=jnp.float32)
    h = jnp.maximum(h + b2_ref[...], 0.0)
    raw = jnp.dot(h.astype(jnp.bfloat16), w3_ref[...],
                  preferred_element_type=jnp.float32) + b3_ref[...]   # (P, 8)

    # ---- volume rendering, per-ray lane-major (samples on lanes) ----
    # (P, 8) -> (tr, ns, 8) is a free sublane split; one small (ns, 8)->(8, ns)
    # minor-dim transpose puts samples on lanes for the whole render stage.
    raw_l = jnp.swapaxes(raw.reshape(tr, ns, RAW_CH), 1, 2)       # (tr, 8, ns)
    rgb = jax.nn.sigmoid(raw_l[:, 0:3, :])                        # (tr, 3, ns)
    sigma = jnp.maximum(raw_l[:, 3:4, :], 0.0)                    # (tr, 1, ns)
    z = zd_ref[:, 0:1, :]                                         # (tr, 1, ns)
    d = zd_ref[:, 1:2, :]                                         # (tr, 1, ns)

    tau = sigma * d                                               # (tr, 1, ns)
    # exclusive per-ray prefix sum of tau: log2(ns)-step Hillis-Steele scan
    # along the lane (sample) axis -- exact f32, no MXU, no masks needed
    # (the sample axis is per-ray, so nothing crosses a ray boundary).
    cum = tau
    shift = 1
    while shift < ns:
        cum = cum + jnp.concatenate(
            [jnp.zeros((tr, 1, shift), jnp.float32), cum[:, :, :ns - shift]],
            axis=2)
        shift *= 2
    trans = jnp.exp(tau - cum)                 # exp(-exclusive_cumsum(tau))
    alpha = 1.0 - jnp.exp(-tau)
    weights = alpha * trans                    # (tr, 1, ns)

    rgb_out = jnp.sum(weights * rgb, axis=2)   # (tr, 3)
    depth = jnp.sum(weights * z, axis=2)       # (tr, 1)
    acc = jnp.sum(weights, axis=2)             # (tr, 1)

    # single lane-dense store: [r, g, b, depth, acc, zeros...]
    # (OUT_PAD=128 is fine at 64 rays; pack tighter if the ray count grows.)
    out_ref[...] = jnp.concatenate(
        [rgb_out, depth, acc, jnp.zeros((tr, OUT_PAD - 5), jnp.float32)], axis=1)


def fused_pe_mlp_render(pts_pad, zd, pe_mat, mlp, b1_eff,
                        *, n_rays, n_samples, tile_rays):
    """Fused PE + MLP + volume render, tiled over rays."""
    assert n_rays % tile_rays == 0
    p_blk = tile_rays * n_samples
    w1 = mlp["w1"].astype(jnp.bfloat16)
    w2 = mlp["w2"].astype(jnp.bfloat16)
    w3 = mlp["w3"].astype(jnp.bfloat16)
    return pl.pallas_call(
        functools.partial(_fused_pe_mlp_render_kernel, ns=n_samples),
        out_shape=jax.ShapeDtypeStruct((n_rays, OUT_PAD), jnp.float32),
        grid=(n_rays // tile_rays,),
        in_specs=[
            pl.BlockSpec((p_blk, PTS_PAD), lambda i: (i, 0)),          # pts (flat)
            pl.BlockSpec((tile_rays, 2, n_samples), lambda i: (i, 0, 0)),  # z / dists
            pl.BlockSpec((PTS_PAD, PE_PAD), lambda i: (0, 0)),         # PE freq matrix
            pl.BlockSpec((PE_PAD, HIDDEN), lambda i: (0, 0)),          # w1 (bf16)
            pl.BlockSpec((1, HIDDEN), lambda i: (0, 0)),               # b1 + cond
            pl.BlockSpec((HIDDEN, HIDDEN), lambda i: (0, 0)),          # w2 (bf16)
            pl.BlockSpec((1, HIDDEN), lambda i: (0, 0)),               # b2
            pl.BlockSpec((HIDDEN, RAW_CH), lambda i: (0, 0)),          # w3 (bf16)
            pl.BlockSpec((1, RAW_CH), lambda i: (0, 0)),               # b3
        ],
        out_specs=pl.BlockSpec((tile_rays, OUT_PAD), lambda i: (i, 0)),
        compiler_params=pltpu.CompilerParams(
            dimension_semantics=("parallel",)),
    )(pts_pad, zd, pe_mat, w1, b1_eff, w2, mlp["b2"], w3, mlp["b3"])


# ============================ model components ================================
def image_encoder(img_nchw, params):
    """3x3 stride-2 conv (pad 1) + ReLU + fused global mean pool."""
    x = jnp.transpose(img_nchw, (0, 2, 3, 1))               # NCHW -> NHWC
    n, h, w, c = x.shape
    ho, wo = h // 2, w // 2
    xp = jnp.pad(x, ((0, 0), (1, 1), (1, 1), (0, 0)))
    cols = []
    for dy in range(3):
        for dx in range(3):
            cols.append(xp[:, dy:dy + 2 * ho:2, dx:dx + 2 * wo:2, :])
    patches = jnp.concatenate(cols, axis=-1).reshape(n * ho * wo, 9 * c)
    patches = jnp.pad(patches, ((0, 0), (0, CONV_K_PAD - 9 * c)))      # K -> 32
    fmap, pooled = pl.pallas_call(                            # single block, no grid
        _conv_pool_kernel,
        out_shape=(jax.ShapeDtypeStruct((patches.shape[0], FMAP_C), jnp.float32),
                   jax.ShapeDtypeStruct((1, FMAP_C), jnp.float32)),
    )(patches, params["conv_w"], params["conv_b"])
    return {"fmap": fmap.reshape(n, ho, wo, FMAP_C), "pooled": pooled}


def motion_infos_forward(data, params):
    # TODO(synk): full SMPL motion-weight-volume / skeletal deformation is reduced
    # to a pose-conditioned latent; 1-row matmul kept in plain JAX (XLA fuses it).
    latent = jax.nn.relu(data["pose"] @ params["pose_w"] + params["pose_b"])
    return {"motion_latent": latent}


def sample_points_along_ray(rays_o, rays_d, near, far, n_samples, perturb):
    t = jnp.linspace(0.0, 1.0, n_samples, dtype=jnp.float32)
    z_vals = near + (far - near) * t[None, :]               # [Nr, Ns]
    # TODO(synk): perturb > 0 stratified jitter omitted (perturb=0, deterministic eval).
    pts = rays_o[:, None, :] + rays_d[:, None, :] * z_vals[..., None]
    return z_vals, pts


def humannerf(rays_o, rays_d, pts, z_vals, data, params, tile_rays):
    nr, ns, _ = pts.shape
    # TODO(synk): pixel-aligned feature sampling (grid_sample of inp_fmap at projected
    # points) replaced by the globally pooled image feature; gathers are left out.
    feat_latent = data["inp_fmap_pooled"] @ params["feat_w"] + params["feat_b"]
    cond = data["motion_latent"] + feat_latent               # [1, HIDDEN], plain JAX
    b1_eff = params["mlp"]["b1"] + cond                      # conditioning folded into b1

    dists = jnp.concatenate(
        [z_vals[:, 1:] - z_vals[:, :-1],
         jnp.full((nr, 1), 1e10, dtype=jnp.float32)], axis=-1)
    dists = dists * jnp.linalg.norm(rays_d, axis=-1, keepdims=True)
    zd = jnp.stack([z_vals, dists], axis=1)                  # [Nr, 2, Ns]

    pts_flat = pts.reshape(nr * ns, 3)
    pts_pad = jnp.pad(pts_flat, ((0, 0), (0, PTS_PAD - 3)))

    packed = fused_pe_mlp_render(
        pts_pad, zd, params["pe_mat"], params["mlp"], b1_eff,
        n_rays=nr, n_samples=ns, tile_rays=tile_rays)
    return {"rgb": packed[:, 0:3],
            "depth": packed[:, 3:4],
            "acc": packed[:, 4:5]}


def process_humannerf(data, params, rays_o, rays_d, near, far, tile_rays):
    z_vals, pts = sample_points_along_ray(rays_o, rays_d, near, far,
                                          cfg.N_samples, cfg.perturb)
    ret = humannerf(rays_o, rays_d, pts, z_vals, data, params, tile_rays)
    render_outs = {}
    for k in ret:
        render_outs.setdefault(k, []).append(ret[k])
    render_outs = {k: jnp.concatenate(render_outs[k], 0) for k in render_outs}
    return render_outs


def network_forward(data, params):
    if cfg.back_net.back_net_on and (not cfg.use_back_img_gt):
        pass  # TODO(synk): back_net inference + horizontal flip path not reproduced.
    if cfg.use_back_img_gt:
        data = dict(data, back_img=data["back_img_gt"])
    if cfg.back_net.back_net_on or cfg.use_back_img_gt:
        img_enc_input = jnp.concatenate([data["inp_img_normed"], data["back_img"]], 0)
    else:
        img_enc_input = data["inp_img_normed"]

    img_enc_out = image_encoder(img_enc_input, params)
    data = dict(data)
    data["inp_fmap"] = img_enc_out["fmap"][0:1]
    data["inp_fmap_pooled"] = img_enc_out["pooled"]
    if cfg.back_net.back_net_on or cfg.use_back_img_gt:
        data["back_fmap"] = img_enc_out["fmap"][1:2]

    rays_o, rays_d = data["rays"]
    rays_o = jnp.reshape(rays_o, (-1, 3))
    rays_d = jnp.reshape(rays_d, (-1, 3))

    nr = rays_o.shape[0]
    steps = _num_render_steps()
    if nr % steps != 0:
        steps = 1
    tile_rays = nr // steps

    data.update(motion_infos_forward(data, params))
    render_outs = process_humannerf(data, params, rays_o, rays_d,
                                    data["near"], data["far"], tile_rays)
    if cfg.back_net.back_net_on or cfg.use_back_img_gt:
        render_outs["back_img"] = data["back_img"]
    return render_outs


# ============================ deterministic params ============================
def _make_pe_matrix():
    """Constant (PTS_PAD, PE_PAD) frequency-expansion matrix for lane-dense PE."""
    e = np.zeros((PTS_PAD, PE_PAD), np.float32)
    for a in range(3):
        e[a, a] = 1.0                                        # passthrough xyz
    for l in range(PE_L):
        for a in range(3):
            e[a, 3 + 3 * l + a] = 2.0 ** l                   # sin block
            e[a, 3 + 3 * PE_L + 3 * l + a] = 2.0 ** l        # cos block
    return jnp.asarray(e)


def init_params(key):
    ks = jax.random.split(key, 6)

    def dense_init(k, fan_in, fan_out):
        w = jax.random.normal(k, (fan_in, fan_out), jnp.float32) / jnp.sqrt(fan_in)
        return w, jnp.zeros((1, fan_out), jnp.float32)

    conv_w, conv_b = dense_init(ks[0], CONV_K_PAD, FMAP_C)   # im2col (K padded) x Cout
    pose_w, pose_b = dense_init(ks[1], 72, HIDDEN)
    feat_w, feat_b = dense_init(ks[2], FMAP_C, HIDDEN)
    w1, b1 = dense_init(ks[3], PE_PAD, HIDDEN)
    w2, b2 = dense_init(ks[4], HIDDEN, HIDDEN)
    w3, b3 = dense_init(ks[5], HIDDEN, 4)
    # pad the 4 real output channels (r, g, b, sigma) to 8 for a sublane-friendly
    # in-kernel transpose; the extra channels are never read.
    w3 = jnp.pad(w3, ((0, 0), (0, RAW_CH - 4)))
    b3 = jnp.pad(b3, ((0, 0), (0, RAW_CH - 4)))
    return {
        "conv_w": conv_w, "conv_b": conv_b,
        "pose_w": pose_w, "pose_b": pose_b,
        "feat_w": feat_w, "feat_b": feat_b,
        "pe_mat": _make_pe_matrix(),
        "mlp": {"w1": w1, "b1": b1, "w2": w2, "b2": b2, "w3": w3, "b3": b3},
    }


# ==================================== main ====================================
if __name__ == "__main__":
    key = jax.random.PRNGKey(0)
    k_img, k_ro, k_rd, k_pose, k_par = jax.random.split(key, 5)

    rays_d = jax.random.normal(k_rd, (N_RAYS, 3), jnp.float32)
    rays_d = rays_d / jnp.linalg.norm(rays_d, axis=-1, keepdims=True)
    data = {
        "inp_img_normed": jax.random.normal(k_img, (1, IMG_C, IMG_H, IMG_W), jnp.float32),
        "rays": (jax.random.normal(k_ro, (N_RAYS, 3), jnp.float32) * 0.1, rays_d),
        "near": jnp.full((N_RAYS, 1), 2.0, jnp.float32),
        "far": jnp.full((N_RAYS, 1), 6.0, jnp.float32),
        "pose": jax.random.normal(k_pose, (1, 72), jnp.float32) * 0.1,
    }
    params = init_params(k_par)

    outs = network_forward(data, params)
    outs = jax.tree_util.tree_map(jax.block_until_ready, outs)

    assert outs["rgb"].shape == (N_RAYS, 3)
    assert outs["depth"].shape == (N_RAYS, 1)
    assert outs["acc"].shape == (N_RAYS, 1)
    assert all(bool(jnp.all(jnp.isfinite(v))) for v in outs.values())
    print("KERNEL_OK")
</pallas_src>

<mosaic_0001>
module attributes {stable_mosaic.version = 11 : i64} {
  func.func @_conv_pool_kernel(%arg0: memref<256x32xf32, #tpu.memory_space<vmem>>, %arg1: memref<32x16xf32, #tpu.memory_space<vmem>>, %arg2: memref<1x16xf32, #tpu.memory_space<vmem>>, %arg3: memref<256x16xf32, #tpu.memory_space<vmem>>, %arg4: memref<1x16xf32, #tpu.memory_space<vmem>>) attributes {dimension_semantics = [], scalar_prefetch = 0 : i64, scratch_operands = 0 : i64, tpu.core_type = #tpu.core_type<tc>} {
    %c0 = arith.constant 0 : index
    %c0_0 = arith.constant 0 : index
    %0 = vector.load %arg0[%c0, %c0_0] : memref<256x32xf32, #tpu.memory_space<vmem>>, vector<256x32xf32>
    %1 = arith.truncf %0 : vector<256x32xf32> to vector<256x32xbf16>
    %c0_1 = arith.constant 0 : index
    %c0_2 = arith.constant 0 : index
    %2 = vector.load %arg1[%c0_1, %c0_2] : memref<32x16xf32, #tpu.memory_space<vmem>>, vector<32x16xf32>
    %3 = arith.truncf %2 : vector<32x16xf32> to vector<32x16xbf16>
    %cst = arith.constant dense<0.000000e+00> : vector<256x16xf32>
    %4 = tpu.matmul %1, %3, %cst {dimension_numbers = #tpu.dot_dimension_numbers<[1], [0], [0], [1], [0, 0, 1, 1], [], []>} : vector<256x32xbf16>, vector<32x16xbf16>, vector<256x16xf32> -> vector<256x16xf32>
    %c0_3 = arith.constant 0 : index
    %c0_4 = arith.constant 0 : index
    %5 = vector.load %arg2[%c0_3, %c0_4] : memref<1x16xf32, #tpu.memory_space<vmem>>, vector<1x16xf32>
    %6 = vector.broadcast %5 : vector<1x16xf32> to vector<256x16xf32>
    %7 = arith.addf %4, %6 : vector<256x16xf32>
    %cst_5 = arith.constant 0.000000e+00 : f32
    %8 = vector.broadcast %cst_5 : f32 to vector<256x16xf32>
    %9 = arith.maximumf %7, %8 : vector<256x16xf32>
    %c0_6 = arith.constant 0 : index
    %c0_7 = arith.constant 0 : index
    %10 = vector.load %arg3[%c0_6, %c0_7] : memref<256x16xf32, #tpu.memory_space<vmem>>, vector<256x16xf32>
    tpu.vector_store %arg3[%c0_6, %c0_7], %9 {strides = array<i32>} : memref<256x16xf32, #tpu.memory_space<vmem>>, vector<256x16xf32>,
    %cst_8 = arith.constant dense<0.000000e+00> : vector<16xf32>
    %11 = vector.multi_reduction <add>, %9, %cst_8 [0] : vector<256x16xf32> to vector<16xf32>
    %12 = vector.shape_cast %11 : vector<16xf32> to vector<1x16xf32>
    %cst_9 = arith.constant 2.560000e+02 : f32
    %13 = vector.broadcast %cst_9 : f32 to vector<1x16xf32>
    %14 = arith.divf %12, %13 : vector<1x16xf32>
    %c0_10 = arith.constant 0 : index
    %c0_11 = arith.constant 0 : index
    %15 = vector.load %arg4[%c0_10, %c0_11] : memref<1x16xf32, #tpu.memory_space<vmem>>, vector<1x16xf32>
    tpu.vector_store %arg4[%c0_10, %c0_11], %14 {strides = array<i32>} : memref<1x16xf32, #tpu.memory_space<vmem>>, vector<1x16xf32>,
    return
  }
}

</mosaic_0001>

<llo_original>
// kernel: tpu_custom_call.1
$region0: #{tpu_custom_call.1}
  #allocation0 [shape = 'u32[]', space=smem, size = 0x4, offset = 0x4, fixed_abs, tag = 'smem constant byte address 0x4 - core index']
  #allocation1 [shape = 'u32[72,128]{1,0:T(1,128)}', space=vmem, size = 0x9000, scoped, tag = 'internal scratch']
  %s0 = inlined_call_operand.vmem [shape: f32[256,32], index: 0, kind: input, shape index: {}]
  %s1 = inlined_call_operand.vmem [shape: f32[32,16], index: 1, kind: input, shape index: {}]
  %s2 = inlined_call_operand.vmem [shape: f32[1,16], index: 2, kind: input, shape index: {}]
  %s3 = inlined_call_operand.vmem [shape: f32[256,16], index: 3, kind: output, shape index: {0}]
  %s4 = inlined_call_operand.hbm [shape: f32[1,16], index: 4, kind: output, shape index: {1}]
  %5 = xla_tuple %s3, %s4
  %s6 = sld [smem:[#allocation0]]
  $region30: #{tpu_custom_call.1} parent=0
    _
  %s8 = ssub.s32 1, %s6
  %s9 = scalar_select 0, %s8, %s6
  $region1: #{tpu_custom_call.1} parent=0
    #allocation2 [shape = 'u8[512]{0}', space=vmem, size = 0x400, scoped, tag = 'output window, operand 1, single buffered']
    #allocation3 [shape = 's32[1]{0}', space=sflag, size = 0x4, scoped, tag = 'scoped memory for tpu_custom_call.1']
    %10 = vsyncpa [#allocation3], 0
    // Predicated region
    $region2: #{tpu_custom_call.1} parent=1 // pred_check
      _
    $region3: #{tpu_custom_call.1} parent=1 // pred_check_branch
      %12 = sbr.rel (0) target = $region5
    $region4: #{tpu_custom_call.1} parent=1 // pred_region
      _
    $region5: #{tpu_custom_call.1} parent=1 // pred_fallthru
      _
    // Predicated region
    $region6: #{tpu_custom_call.1} parent=1 // pred_check
      _
    $region7: #{tpu_custom_call.1} parent=1 // pred_check_branch
      %14 = sbr.rel (0) target = $region9
    $region8: #{tpu_custom_call.1} parent=1 // pred_region
      _
    $region9: #{tpu_custom_call.1} parent=1 // pred_fallthru
      _
    // Predicated region
    $region10: #{tpu_custom_call.1} parent=1 // pred_check
      _
    $region11: #{tpu_custom_call.1} parent=1 // pred_check_branch
      %16 = sbr.rel (0) target = $region13
    $region12: #{tpu_custom_call.1} parent=1 // pred_region
      _
    $region13: #{tpu_custom_call.1} parent=1 // pred_fallthru
      _
    %v18 = vld [vmem:[%s0] sm:$0xff]
    %v19 = vld [vmem:[%s0 + $0x8] sm:$0xff]
    %v20 = vld [vmem:[%s0 + $0x10] sm:$0xff]
    %v21 = vld [vmem:[%s0 + $0x18] sm:$0xff]
    %v22 = vld [vmem:[%s0 + $0x20] sm:$0xff]
    %v23 = vld [vmem:[%s0 + $0x28] sm:$0xff]
    %v24 = vld [vmem:[%s0 + $0x30] sm:$0xff]
    %v25 = vld [vmem:[%s0 + $0x38] sm:$0xff]
    %v26 = vld [vmem:[%s0 + $0x40] sm:$0xff]
    %v27 = vld [vmem:[%s0 + $0x48] sm:$0xff]
    %v28 = vld [vmem:[%s0 + $0x50] sm:$0xff]
    %v29 = vld [vmem:[%s0 + $0x58] sm:$0xff]
    %v30 = vld [vmem:[%s0 + $0x60] sm:$0xff]
    %v31 = vld [vmem:[%s0 + $0x68] sm:$0xff]
    %v32 = vld [vmem:[%s0 + $0x70] sm:$0xff]
    %v33 = vld [vmem:[%s0 + $0x78] sm:$0xff]
    %v34 = vld [vmem:[%s0 + $0x80] sm:$0xff]
    %v35 = vld [vmem:[%s0 + $0x88] sm:$0xff]
    %v36 = vld [vmem:[%s0 + $0x90] sm:$0xff]
    %v37 = vld [vmem:[%s0 + $0x98] sm:$0xff]
    %v38 = vld [vmem:[%s0 + $0xa0] sm:$0xff]
    %v39 = vld [vmem:[%s0 + $0xa8] sm:$0xff]
    %v40 = vld [vmem:[%s0 + $0xb0] sm:$0xff]
    %v41 = vld [vmem:[%s0 + $0xb8] sm:$0xff]
    %v42 = vld [vmem:[%s0 + $0xc0] sm:$0xff]
    %v43 = vld [vmem:[%s0 + $0xc8] sm:$0xff]
    %v44 = vld [vmem:[%s0 + $0xd0] sm:$0xff]
    %v45 = vld [vmem:[%s0 + $0xd8] sm:$0xff]
    %v46 = vld [vmem:[%s0 + $0xe0] sm:$0xff]
    %v47 = vld [vmem:[%s0 + $0xe8] sm:$0xff]
    %v48 = vld [vmem:[%s0 + $0xf0] sm:$0xff]
    %v49 = vld [vmem:[%s0 + $0xf8] sm:$0xff]
    %v50 = vpack.c.bf16 %v19, %v18
    %v51 = vpack.c.bf16 %v21, %v20
    %v52 = vpack.c.bf16 %v23, %v22
    %v53 = vpack.c.bf16 %v25, %v24
    %v54 = vpack.c.bf16 %v27, %v26
    %v55 = vpack.c.bf16 %v29, %v28
    %v56 = vpack.c.bf16 %v31, %v30
    %v57 = vpack.c.bf16 %v33, %v32
    %v58 = vpack.c.bf16 %v35, %v34
    %v59 = vpack.c.bf16 %v37, %v36
    %v60 = vpack.c.bf16 %v39, %v38
    %v61 = vpack.c.bf16 %v41, %v40
    %v62 = vpack.c.bf16 %v43, %v42
    %v63 = vpack.c.bf16 %v45, %v44
    %v64 = vpack.c.bf16 %v47, %v46
    %v65 = vpack.c.bf16 %v49, %v48
    %v66 = vld [vmem:[%s1] sm:$0xff]
    %v67 = vld [vmem:[%s1 + $0x8] sm:$0xff]
    %v68 = vld [vmem:[%s1 + $0x10] sm:$0xff]
    %v69 = vld [vmem:[%s1 + $0x18] sm:$0xff]
    %v70 = vpack.c.bf16 %v67, %v66
    %v71 = vpack.c.bf16 %v69, %v68
    %v72 = vld [vmem:[%s2] sm:$0x1]
    %v74 = vperm.slane %v72, 0
    %vm76 = vcmask 261120
    %v78 = vsel %vm76, %v50, 0
    %v81 = vsel %vm76, %v51, 0
    %v84 = vsel %vm76, %v52, 0
    %v87 = vsel %vm76, %v53, 0
    %v90 = vsel %vm76, %v54, 0
    %v93 = vsel %vm76, %v55, 0
    %v96 = vsel %vm76, %v56, 0
    %v99 = vsel %vm76, %v57, 0
    %v102 = vsel %vm76, %v58, 0
    %v105 = vsel %vm76, %v59, 0
    %v108 = vsel %vm76, %v60, 0
    %v111 = vsel %vm76, %v61, 0
    %v114 = vsel %vm76, %v62, 0
    %v117 = vsel %vm76, %v63, 0
    %v120 = vsel %vm76, %v64, 0
    %v123 = vsel %vm76, %v65, 0
    %125 = vmatpush.bf16.msra.mxu0 0
    %126 = vmatpush.bf16.msra.mxu0 0
    %127 = vmatpush.bf16.msra.mxu0 0
    %128 = vmatpush.bf16.msra.mxu0 0
    %129 = vmatpush.bf16.msra.mxu0 0
    %130 = vmatpush.bf16.msra.mxu0 0
    %131 = vmatpush.bf16.msra.mxu0 %v71
    %132 = vmatpush.bf16.msra.mxu0 %v70
    %133 = vmatmul.bf16.gmra.mxu0 %v78
    %v134 = vpop.f32.mrf.mxu0
    %v135 = vadd.f32 %v74, %v134
    %v136 = vpop.f32.mrf.mxu0
    %v137 = vadd.f32 %v74, %v136
    %138 = vmatmul.bf16.gmra.mxu0 %v81
    %v139 = vpop.f32.mrf.mxu0
    %v140 = vadd.f32 %v74, %v139
    %v141 = vpop.f32.mrf.mxu0
    %v142 = vadd.f32 %v74, %v141
    %143 = vmatmul.bf16.gmra.mxu0 %v84
    %v144 = vpop.f32.mrf.mxu0
    %v145 = vadd.f32 %v74, %v144
    %v146 = vpop.f32.mrf.mxu0
    %v147 = vadd.f32 %v74, %v146
    %148 = vmatmul.bf16.gmra.mxu0 %v87
    %v149 = vpop.f32.mrf.mxu0
    %v150 = vadd.f32 %v74, %v149
    %v151 = vpop.f32.mrf.mxu0
    %v152 = vadd.f32 %v74, %v151
    %153 = vmatmul.bf16.gmra.mxu0 %v90
    %v154 = vpop.f32.mrf.mxu0
    %v155 = vadd.f32 %v74, %v154
    %v156 = vpop.f32.mrf.mxu0
    %v157 = vadd.f32 %v74, %v156
    %158 = vmatmul.bf16.gmra.mxu0 %v93
    %v159 = vpop.f32.mrf.mxu0
    %v160 = vadd.f32 %v74, %v159
    %v161 = vpop.f32.mrf.mxu0
    %v162 = vadd.f32 %v74, %v161
    %163 = vmatmul.bf16.gmra.mxu0 %v96
    %v164 = vpop.f32.mrf.mxu0
    %v165 = vadd.f32 %v74, %v164
    %v166 = vpop.f32.mrf.mxu0
    %v167 = vadd.f32 %v74, %v166
    %168 = vmatmul.bf16.gmra.mxu0 %v99
    %v169 = vpop.f32.mrf.mxu0
    %v170 = vadd.f32 %v74, %v169
    %v171 = vpop.f32.mrf.mxu0
    %v172 = vadd.f32 %v74, %v171
    %173 = vmatmul.bf16.gmra.mxu0 %v102
    %v174 = vpop.f32.mrf.mxu0
    %v175 = vadd.f32 %v74, %v174
    %v176 = vpop.f32.mrf.mxu0
    %v177 = vadd.f32 %v74, %v176
    %178 = vmatmul.bf16.gmra.mxu0 %v105
    %v179 = vpop.f32.mrf.mxu0
    %v180 = vadd.f32 %v74, %v179
    %v181 = vpop.f32.mrf.mxu0
    %v182 = vadd.f32 %v74, %v181
    %183 = vmatmul.bf16.gmra.mxu0 %v108
    %v184 = vpop.f32.mrf.mxu0
    %v185 = vadd.f32 %v74, %v184
    %v186 = vpop.f32.mrf.mxu0
    %v187 = vadd.f32 %v74, %v186
    %188 = vmatmul.bf16.gmra.mxu0 %v111
    %v189 = vpop.f32.mrf.mxu0
    %v190 = vadd.f32 %v74, %v189
    %v191 = vpop.f32.mrf.mxu0
    %v192 = vadd.f32 %v74, %v191
    %193 = vmatmul.bf16.gmra.mxu0 %v114
    %v194 = vpop.f32.mrf.mxu0
    %v195 = vadd.f32 %v74, %v194
    %v196 = vpop.f32.mrf.mxu0
    %v197 = vadd.f32 %v74, %v196
    %198 = vmatmul.bf16.gmra.mxu0 %v117
    %v199 = vpop.f32.mrf.mxu0
    %v200 = vadd.f32 %v74, %v199
    %v201 = vpop.f32.mrf.mxu0
    %v202 = vadd.f32 %v74, %v201
    %203 = vmatmul.bf16.gmra.mxu0 %v120
    %v204 = vpop.f32.mrf.mxu0
    %v205 = vadd.f32 %v74, %v204
    %v206 = vpop.f32.mrf.mxu0
    %v207 = vadd.f32 %v74, %v206
    %208 = vmatmul.bf16.gmra.mxu0 %v123
    %v209 = vpop.f32.mrf.mxu0
    %v210 = vadd.f32 %v74, %v209
    %v211 = vpop.f32.mrf.mxu0
    %v212 = vadd.f32 %v74, %v211
    %213 = vdwg.mxu0
    %v214 = vmax.f32 %v135, 0.0
    %v215 = vmax.f32 %v137, 0.0
    %v216 = vmax.f32 %v140, 0.0
    %v217 = vmax.f32 %v142, 0.0
    %v218 = vmax.f32 %v145, 0.0
    %v219 = vmax.f32 %v147, 0.0
    %v220 = vmax.f32 %v150, 0.0
    %v221 = vmax.f32 %v152, 0.0
    %v222 = vmax.f32 %v155, 0.0
    %v223 = vmax.f32 %v157, 0.0
    %v224 = vmax.f32 %v160, 0.0
    %v225 = vmax.f32 %v162, 0.0
    %v226 = vmax.f32 %v165, 0.0
    %v227 = vmax.f32 %v167, 0.0
    %v228 = vmax.f32 %v170, 0.0
    %v229 = vmax.f32 %v172, 0.0
    %v230 = vmax.f32 %v175, 0.0
    %v231 = vmax.f32 %v177, 0.0
    %v232 = vmax.f32 %v180, 0.0
    %v233 = vmax.f32 %v182, 0.0
    %v234 = vmax.f32 %v185, 0.0
    %v235 = vmax.f32 %v187, 0.0
    %v236 = vmax.f32 %v190, 0.0
    %v237 = vmax.f32 %v192, 0.0
    %v238 = vmax.f32 %v195, 0.0
    %v239 = vmax.f32 %v197, 0.0
    %v240 = vmax.f32 %v200, 0.0
    %v241 = vmax.f32 %v202, 0.0
    %v242 = vmax.f32 %v205, 0.0
    %v243 = vmax.f32 %v207, 0.0
    %v244 = vmax.f32 %v210, 0.0
    %v245 = vmax.f32 %v212, 0.0
    %vm246 = vcmask 130048
    %247 = vst.msk [vmem:[%s3] sm:$0xff] %vm246, %v214
    %248 = vst.msk [vmem:[%s3 + $0x8] sm:$0xff] %vm246, %v215
    %249 = vst.msk [vmem:[%s3 + $0x10] sm:$0xff] %vm246, %v216
    %250 = vst.msk [vmem:[%s3 + $0x18] sm:$0xff] %vm246, %v217
    %251 = vst.msk [vmem:[%s3 + $0x20] sm:$0xff] %vm246, %v218
    %252 = vst.msk [vmem:[%s3 + $0x28] sm:$0xff] %vm246, %v219
    %253 = vst.msk [vmem:[%s3 + $0x30] sm:$0xff] %vm246, %v220
    %254 = vst.msk [vmem:[%s3 + $0x38] sm:$0xff] %vm246, %v221
    %255 = vst.msk [vmem:[%s3 + $0x40] sm:$0xff] %vm246, %v222
    %256 = vst.msk [vmem:[%s3 + $0x48] sm:$0xff] %vm246, %v223
    %257 = vst.msk [vmem:[%s3 + $0x50] sm:$0xff] %vm246, %v224
    %258 = vst.msk [vmem:[%s3 + $0x58] sm:$0xff] %vm246, %v225
    %259 = vst.msk [vmem:[%s3 + $0x60] sm:$0xff] %vm246, %v226
    %260 = vst.msk [vmem:[%s3 + $0x68] sm:$0xff] %vm246, %v227
    %261 = vst.msk [vmem:[%s3 + $0x70] sm:$0xff] %vm246, %v228
    %262 = vst.msk [vmem:[%s3 + $0x78] sm:$0xff] %vm246, %v229
    %263 = vst.msk [vmem:[%s3 + $0x80] sm:$0xff] %vm246, %v230
    %264 = vst.msk [vmem:[%s3 + $0x88] sm:$0xff] %vm246, %v231
    %265 = vst.msk [vmem:[%s3 + $0x90] sm:$0xff] %vm246, %v232
    %266 = vst.msk [vmem:[%s3 + $0x98] sm:$0xff] %vm246, %v233
    %267 = vst.msk [vmem:[%s3 + $0xa0] sm:$0xff] %vm246, %v234
    %268 = vst.msk [vmem:[%s3 + $0xa8] sm:$0xff] %vm246, %v235
    %269 = vst.msk [vmem:[%s3 + $0xb0] sm:$0xff] %vm246, %v236
    %270 = vst.msk [vmem:[%s3 + $0xb8] sm:$0xff] %vm246, %v237
    %271 = vst.msk [vmem:[%s3 + $0xc0] sm:$0xff] %vm246, %v238
    %272 = vst.msk [vmem:[%s3 + $0xc8] sm:$0xff] %vm246, %v239
    %273 = vst.msk [vmem:[%s3 + $0xd0] sm:$0xff] %vm246, %v240
    %274 = vst.msk [vmem:[%s3 + $0xd8] sm:$0xff] %vm246, %v241
    %275 = vst.msk [vmem:[%s3 + $0xe0] sm:$0xff] %vm246, %v242
    %276 = vst.msk [vmem:[%s3 + $0xe8] sm:$0xff] %vm246, %v243
    %277 = vst.msk [vmem:[%s3 + $0xf0] sm:$0xff] %vm246, %v244
    %278 = vst.msk [vmem:[%s3 + $0xf8] sm:$0xff] %vm246, %v245
    %v279 = vsel %vm246, %v214, 0.0
    %v280 = vsel %vm246, %v215, 0.0
    %v281 = vadd.f32 %v279, %v280
    %v282 = vsel %vm246, %v216, 0.0
    %v283 = vadd.f32 %v281, %v282
    %v284 = vsel %vm246, %v217, 0.0
    %v285 = vadd.f32 %v283, %v284
    %v286 = vsel %vm246, %v218, 0.0
    %v287 = vadd.f32 %v285, %v286
    %v288 = vsel %vm246, %v219, 0.0
    %v289 = vadd.f32 %v287, %v288
    %v290 = vsel %vm246, %v220, 0.0
    %v291 = vadd.f32 %v289, %v290
    %v292 = vsel %vm246, %v221, 0.0
    %v293 = vadd.f32 %v291, %v292
    %v294 = vsel %vm246, %v222, 0.0
    %v295 = vadd.f32 %v293, %v294
    %v296 = vsel %vm246, %v223, 0.0
    %v297 = vadd.f32 %v295, %v296
    %v298 = vsel %vm246, %v224, 0.0
    %v299 = vadd.f32 %v297, %v298
    %v300 = vsel %vm246, %v225, 0.0
    %v301 = vadd.f32 %v299, %v300
    %v302 = vsel %vm246, %v226, 0.0
    %v303 = vadd.f32 %v301, %v302
    %v304 = vsel %vm246, %v227, 0.0
    %v305 = vadd.f32 %v303, %v304
    %v306 = vsel %vm246, %v228, 0.0
    %v307 = vadd.f32 %v305, %v306
    %v308 = vsel %vm246, %v229, 0.0
    %v309 = vadd.f32 %v307, %v308
    %v310 = vsel %vm246, %v230, 0.0
    %v311 = vadd.f32 %v309, %v310
    %v312 = vsel %vm246, %v231, 0.0
    %v313 = vadd.f32 %v311, %v312
    %v314 = vsel %vm246, %v232, 0.0
    %v315 = vadd.f32 %v313, %v314
    %v316 = vsel %vm246, %v233, 0.0
    %v317 = vadd.f32 %v315, %v316
    %v318 = vsel %vm246, %v234, 0.0
    %v319 = vadd.f32 %v317, %v318
    %v320 = vsel %vm246, %v235, 0.0
    %v321 = vadd.f32 %v319, %v320
    %v322 = vsel %vm246, %v236, 0.0
    %v323 = vadd.f32 %v321, %v322
    %v324 = vsel %vm246, %v237, 0.0
    %v325 = vadd.f32 %v323, %v324
    %v326 = vsel %vm246, %v238, 0.0
    %v327 = vadd.f32 %v325, %v326
    %v328 = vsel %vm246, %v239, 0.0
    %v329 = vadd.f32 %v327, %v328
    %v330 = vsel %vm246, %v240, 0.0
    %v331 = vadd.f32 %v329, %v330
    %v332 = vsel %vm246, %v241, 0.0
    %v333 = vadd.f32 %v331, %v332
    %v334 = vsel %vm246, %v242, 0.0
    %v335 = vadd.f32 %v333, %v334
    %v336 = vsel %vm246, %v243, 0.0
    %v337 = vadd.f32 %v335, %v336
    %v338 = vsel %vm246, %v244, 0.0
    %v339 = vadd.f32 %v337, %v338
    %v340 = vsel %vm246, %v245, 0.0
    %v341 = vadd.f32 %v339, %v340
    %v342 = vrot.slane %v341, 4
    %v343 = vadd.f32 %v341, %v342
    %v344 = vrot.slane %v343, 2
    %v345 = vadd.f32 %v343, %v344
    %v346 = vrot.slane %v345, 1
    %v347 = vadd.f32 %v345, %v346
    %v348 = vrcp.pop 256.0
    %v349 = vmul.f32 256.0, %v348
    %v350 = vsub.f32 1.0, %v349
    %v351 = vmul.f32 %v348, %v350
    %v352 = vadd.f32 %v348, %v351
    %vm353 = vweird.f32 %v348
    %v354 = vsel %vm353, %v348, %v352
    %v355 = vmul.f32 %v347, %v354
    %vm356 = vcmask 122880
    %357 = vst.msk [vmem:[#allocation2] sm:$0x1] %vm356, %v355
    // Predicated region
    $region14: #{tpu_custom_call.1} parent=1 // pred_check
      _
    $region15: #{tpu_custom_call.1} parent=1 // pred_check_branch
      %359 = sbr.rel (0) target = $region17
    $region16: #{tpu_custom_call.1} parent=1 // pred_region
      _
    $region17: #{tpu_custom_call.1} parent=1 // pred_fallthru
      _
    // Predicated region
    $region18: #{tpu_custom_call.1} parent=1 // pred_check
      _
    $region19: #{tpu_custom_call.1} parent=1 // pred_check_branch
      %361 = sbr.rel (0) target = $region21
    $region20: #{tpu_custom_call.1} parent=1 // pred_region
      %363 = vsyncadd [#allocation3], 0
      %s365 = sshll.u32 [#allocation2], 4
      %s366 = int_to_ptr.vmem [resolvable:$true] %s365
      %s367 = sshll.u32 %s4, 4
      %s368 = int_to_ptr.hbm [resolvable:$true] %s367
      %370 = dma.vmem_to_hbm [thread:$0]  %s366, 16, %s368, [#allocation3]
    $region21: #{tpu_custom_call.1} parent=1 // pred_fallthru
      _
    // Predicated region
    $region22: #{tpu_custom_call.1} parent=1 // pred_check
      _
    $region23: #{tpu_custom_call.1} parent=1 // pred_check_branch
      %372 = sbr.rel (0) target = $region25
    $region24: #{tpu_custom_call.1} parent=1 // pred_region
      _
    $region25: #{tpu_custom_call.1} parent=1 // pred_fallthru
      _
    // Predicated region
    $region26: #{tpu_custom_call.1} parent=1 // pred_check
      _
    $region27: #{tpu_custom_call.1} parent=1 // pred_check_branch
      %374 = sbr.rel (0) target = $region29
    $region28: #{tpu_custom_call.1} parent=1 // pred_region
      %376 = dma.done [#allocation3], 16
    $region29: #{tpu_custom_call.1} parent=1 // pred_fallthru
      _
    %377 = vsyncpa [#allocation3], 1

</llo_original>
